<compile_context>
chip_gen: v7x
topology: tpu7x:2x2x1
jax: 0.10.0
libtpu: 0.0.40
codegen_flags: <defaults>
</compile_context>

<pallas_src>
import jax
import jax.numpy as jnp
from jax.experimental import pallas as pl
from jax.experimental.pallas import tpu as pltpu

EPS = 1e-5

# Feature sizes implied by the BYOL spec.
OC = 128          # backbone output channels / projection-head input
PROJ_HID = 64
PROJ_OUT = 16
PRED_HID = 32
PRED_OUT = 16
CK_PAD = 40       # im2col contraction dim (C*KH*KW = 36) zero-padded to 40 (8-aligned)

# Row offsets inside the packed HEAD-weight slab (f32, lanes = 128, offsets 8-aligned).
W1_R0 = 0                       # (128, 64) projection Linear1 (bias=False)
W2_R0 = W1_R0 + OC              # ( 64, 16) projection Linear2
W3_R0 = W2_R0 + PROJ_HID        # ( 16, 32) prediction Linear1 (bias=False)
W4_R0 = W3_R0 + PROJ_OUT        # ( 32, 16) prediction Linear2
HW_ROWS = W4_R0 + PRED_HID      # = 240

# Row indices inside the packed vector slab (8, 128) f32.
V_CONVB, V_G1, V_BE1, V_B2, V_G2, V_BE2, V_B4 = range(7)


# ----------------------------------------------------------------------------
# Fused kernel: per-image conv-as-matmul + ReLU + GAP accumulation; full-batch
# projection + prediction heads (with batch-stat BN) on the last grid step.
# ----------------------------------------------------------------------------
def byol_fused_kernel(patch_ref, cw_ref, hw_ref, v_ref, out_ref, pooled_ref):
    # patch_ref:  (HW, 40)   bf16 im2col patches for image i (K zero-padded 36->40)
    # cw_ref:     (40, 128)  bf16 conv weight (K padded to 40)
    # hw_ref:     (240, 128) f32 packed head weights (see row offsets above)
    # v_ref:      (8, 128)   f32 packed vectors (conv bias, BN gamma/beta, linear biases)
    # out_ref:    (B, 16)    f32 prediction-head output (written on last step only)
    # pooled_ref: (B, 128)   f32 VMEM scratch: per-image global-average-pooled features
    i = pl.program_id(0)
    hw_rows = patch_ref.shape[0]

    # ---- backbone: Conv2d(3x3, pad=1) as bf16 matmul (f32 acc) + bias + ReLU + GAP ----
    acts = jnp.dot(patch_ref[...], cw_ref[...],
                   preferred_element_type=jnp.float32)               # (HW, 128) f32
    acts = jnp.maximum(acts + v_ref[V_CONVB:V_CONVB + 1, :], 0.0)
    pooled_ref[pl.ds(i, 1), :] = (
        jnp.sum(acts, axis=0, keepdims=True) * (1.0 / hw_rows))      # (1, 128)

    # ---- heads: run ONCE over the full batch (BN needs full-batch statistics) ----
    @pl.when(i == pl.num_programs(0) - 1)
    def _heads():
        y = pooled_ref[...]                                           # (B, 128) f32

        # projection head: Linear(128,64,no bias) -> BN(64) -> ReLU -> Linear(64,16)
        h = jnp.dot(y, hw_ref[W1_R0:W1_R0 + OC, 0:PROJ_HID],
                    preferred_element_type=jnp.float32)               # (B, 64)
        mu = jnp.mean(h, axis=0, keepdims=True)
        var = jnp.mean((h - mu) ** 2, axis=0, keepdims=True)          # biased (train mode)
        h = (h - mu) * jax.lax.rsqrt(var + EPS) * v_ref[V_G1:V_G1 + 1, 0:PROJ_HID] \
            + v_ref[V_BE1:V_BE1 + 1, 0:PROJ_HID]
        h = jnp.maximum(h, 0.0)
        z = jnp.dot(h, hw_ref[W2_R0:W2_R0 + PROJ_HID, 0:PROJ_OUT],
                    preferred_element_type=jnp.float32) \
            + v_ref[V_B2:V_B2 + 1, 0:PROJ_OUT]                        # (B, 16)

        # prediction head: Linear(16,32,no bias) -> BN(32) -> ReLU -> Linear(32,16)
        h2 = jnp.dot(z, hw_ref[W3_R0:W3_R0 + PROJ_OUT, 0:PRED_HID],
                     preferred_element_type=jnp.float32)              # (B, 32)
        mu2 = jnp.mean(h2, axis=0, keepdims=True)
        var2 = jnp.mean((h2 - mu2) ** 2, axis=0, keepdims=True)
        h2 = (h2 - mu2) * jax.lax.rsqrt(var2 + EPS) * v_ref[V_G2:V_G2 + 1, 0:PRED_HID] \
             + v_ref[V_BE2:V_BE2 + 1, 0:PRED_HID]
        h2 = jnp.maximum(h2, 0.0)
        p = jnp.dot(h2, hw_ref[W4_R0:W4_R0 + PRED_HID, 0:PRED_OUT],
                    preferred_element_type=jnp.float32) \
            + v_ref[V_B4:V_B4 + 1, 0:PRED_OUT]                        # (B, 16)

        out_ref[...] = p


# ----------------------------------------------------------------------------
# Wrapper (im2col glue in plain JAX, single pallas_call with grid over images)
# ----------------------------------------------------------------------------
def _im2col(x_nchw, kh_sz=3, kw_sz=3):
    """(B, C, H, W) -> (B*H*W, C*KH*KW) patches for a 3x3, pad=1 conv."""
    B, C, H, W = x_nchw.shape
    x_pad = jnp.pad(x_nchw, ((0, 0), (0, 0), (1, 1), (1, 1)))
    cols = []
    for kh in range(kh_sz):
        for kw in range(kw_sz):
            cols.append(x_pad[:, :, kh:kh + H, kw:kw + W])     # (B, C, H, W)
    patches = jnp.stack(cols, axis=-1)                          # (B, C, H, W, KH*KW)
    patches = jnp.transpose(patches, (0, 2, 3, 1, 4))           # (B, H, W, C, KH*KW)
    return patches.reshape(B * H * W, C * kh_sz * kw_sz)
# TODO(synk): for large H,W, move im2col into the kernel (9 shifted matmuls on a DMA'd
# padded input) to avoid the 9x host-side patch replication through HBM.


def byol_forward_pallas(x_nchw, cw_slab, hw_slab, v_slab):
    B, C, H, W = x_nchw.shape
    HW = H * W
    ck = C * 9

    patches = _im2col(x_nchw)                                   # (B*HW, 36) f32
    patches = jnp.pad(patches, ((0, 0), (0, CK_PAD - ck)))      # K padded only to 40
    patches = patches.astype(jnp.bfloat16)                      # bf16 MXU feed

    flops = (2 * B * HW * CK_PAD * OC
             + 2 * B * (OC * PROJ_HID + PROJ_HID * PROJ_OUT
                        + PROJ_OUT * PRED_HID + PRED_HID * PRED_OUT))
    bytes_accessed = (B * HW * CK_PAD * 2            # bf16 patches
                      + CK_PAD * OC * 2              # bf16 conv weight
                      + HW_ROWS * 128 * 4            # f32 head weights
                      + 8 * 128 * 4                  # f32 vectors
                      + B * PRED_OUT * 4)            # f32 output

    return pl.pallas_call(
        byol_fused_kernel,
        out_shape=jax.ShapeDtypeStruct((B, PRED_OUT), jnp.float32),
        grid_spec=pltpu.PrefetchScalarGridSpec(
            num_scalar_prefetch=0,
            grid=(B,),                               # one image's HW rows per step
            in_specs=[
                pl.BlockSpec((HW, CK_PAD), lambda i: (i, 0)),      # patches tile (pipelined)
                pl.BlockSpec((CK_PAD, OC), lambda i: (0, 0)),      # conv weight (resident)
                pl.BlockSpec((HW_ROWS, 128), lambda i: (0, 0)),    # head weights (resident)
                pl.BlockSpec((8, 128), lambda i: (0, 0)),          # vectors (resident)
            ],
            out_specs=pl.BlockSpec((B, PRED_OUT), lambda i: (0, 0)),
            scratch_shapes=[pltpu.VMEM((B, OC), jnp.float32)],     # pooled GAP accumulator
        ),
        compiler_params=pltpu.CompilerParams(
            # "arbitrary": pooled accumulator + full-batch BN head phase carry across steps.
            dimension_semantics=("arbitrary",),
        ),
        cost_estimate=pl.CostEstimate(
            flops=flops, transcendentals=0, bytes_accessed=bytes_accessed),
    )(patches, cw_slab, hw_slab, v_slab)


byol_forward = jax.jit(byol_forward_pallas)


# ----------------------------------------------------------------------------
# Parameter construction (deterministic, synthetic) and packing into slabs
# ----------------------------------------------------------------------------
def init_params(key, c_in=4):
    ks = jax.random.split(key, 8)
    s = 0.05
    conv_w = jax.random.normal(ks[0], (OC, c_in, 3, 3), jnp.float32) * s
    conv_b = jax.random.normal(ks[1], (OC,), jnp.float32) * s
    # projection head: Linear(128,64,bias=False) -> BN(64) -> ReLU -> Linear(64,16)
    w1 = jax.random.normal(ks[2], (OC, PROJ_HID), jnp.float32) * s
    g1 = jnp.ones((PROJ_HID,), jnp.float32)      # BN gamma (PyTorch default init)
    be1 = jnp.zeros((PROJ_HID,), jnp.float32)    # BN beta
    w2 = jax.random.normal(ks[3], (PROJ_HID, PROJ_OUT), jnp.float32) * s
    b2 = jax.random.normal(ks[4], (PROJ_OUT,), jnp.float32) * s
    # prediction head: Linear(16,32,bias=False) -> BN(32) -> ReLU -> Linear(32,16)
    w3 = jax.random.normal(ks[5], (PROJ_OUT, PRED_HID), jnp.float32) * s
    g2 = jnp.ones((PRED_HID,), jnp.float32)
    be2 = jnp.zeros((PRED_HID,), jnp.float32)
    w4 = jax.random.normal(ks[6], (PRED_HID, PRED_OUT), jnp.float32) * s
    b4 = jax.random.normal(ks[7], (PRED_OUT,), jnp.float32) * s
    return conv_w, conv_b, w1, g1, be1, w2, b2, w3, g2, be2, w4, b4


def pack_params(conv_w, conv_b, w1, g1, be1, w2, b2, w3, g2, be2, w4, b4):
    ck = conv_w.shape[1] * conv_w.shape[2] * conv_w.shape[3]
    w_conv = conv_w.reshape(OC, ck).T                              # (36, 128), (c,kh,kw) order
    cw_slab = jnp.pad(w_conv, ((0, CK_PAD - ck), (0, 0))).astype(jnp.bfloat16)   # (40, 128)

    def pad_cols(m):
        return jnp.pad(m, ((0, 0), (0, 128 - m.shape[1])))

    hw_slab = jnp.concatenate(
        [pad_cols(w1), pad_cols(w2), pad_cols(w3), pad_cols(w4)], axis=0)
    assert hw_slab.shape == (HW_ROWS, 128)

    def pad_vec(v):
        return jnp.pad(v, (0, 128 - v.shape[0]))[None, :]

    v_slab = jnp.concatenate(
        [pad_vec(conv_b), pad_vec(g1), pad_vec(be1), pad_vec(b2),
         pad_vec(g2), pad_vec(be2), pad_vec(b4),
         jnp.zeros((1, 128), jnp.float32)], axis=0)                # (8, 128)
    return cw_slab, hw_slab, v_slab


if __name__ == "__main__":
    key = jax.random.PRNGKey(0)
    k_x, k_p = jax.random.split(key)

    B, C, H, W = 2, 4, 16, 16                   # NCHW, matching the PyTorch conv input
    x = jax.random.normal(k_x, (B, C, H, W), jnp.float32)

    params = init_params(k_p, c_in=C)
    cw_slab, hw_slab, v_slab = pack_params(*params)   # packed once, outside the jitted forward

    # TODO(synk): forward_momentum / EMA teacher update and the training loop (optimizer,
    # deactivate_requires_grad) are host-side training logic, not part of this forward kernel.
    p = byol_forward(x, cw_slab, hw_slab, v_slab)
    jax.block_until_ready(p)
    assert p.shape == (B, PRED_OUT) and p.dtype == jnp.float32
    print("KERNEL_OK")
</pallas_src>

<mosaic_0001>
module attributes {stable_mosaic.version = 11 : i64} {
  func.func @byol_fused_kernel(%arg0: i32, %arg1: memref<256x40xbf16, #tpu.memory_space<vmem>>, %arg2: memref<40x128xbf16, #tpu.memory_space<vmem>>, %arg3: memref<240x128xf32, #tpu.memory_space<vmem>>, %arg4: memref<8x128xf32, #tpu.memory_space<vmem>>, %arg5: memref<2x16xf32, #tpu.memory_space<vmem>>, %arg6: memref<2x128xf32, #tpu.memory_space<vmem>>) attributes {dimension_semantics = [#tpu.dimension_semantics<arbitrary>], iteration_bounds = array<i64: 2>, scalar_prefetch = 0 : i64, scratch_operands = 1 : i64, tpu.core_type = #tpu.core_type<tc>, window_params = [{transform_indices = @transform_0, window_bounds = array<i64: 256, 40>}, {pipeline_mode = #tpu.pipeline_mode<synchronous>, transform_indices = @transform_1, window_bounds = array<i64: 40, 128>}, {pipeline_mode = #tpu.pipeline_mode<synchronous>, transform_indices = @transform_2, window_bounds = array<i64: 240, 128>}, {pipeline_mode = #tpu.pipeline_mode<synchronous>, transform_indices = @transform_3, window_bounds = array<i64: 8, 128>}, {pipeline_mode = #tpu.pipeline_mode<synchronous>, transform_indices = @transform_4, window_bounds = array<i64: 2, 16>}]} {
    %c0 = arith.constant 0 : index
    %c0_0 = arith.constant 0 : index
    %0 = vector.load %arg1[%c0, %c0_0] : memref<256x40xbf16, #tpu.memory_space<vmem>>, vector<256x40xbf16>
    %c0_1 = arith.constant 0 : index
    %c0_2 = arith.constant 0 : index
    %1 = vector.load %arg2[%c0_1, %c0_2] : memref<40x128xbf16, #tpu.memory_space<vmem>>, vector<40x128xbf16>
    %cst = arith.constant dense<0.000000e+00> : vector<256x128xf32>
    %2 = tpu.matmul %0, %1, %cst {dimension_numbers = #tpu.dot_dimension_numbers<[1], [0], [0], [1], [0, 0, 1, 1], [], []>} : vector<256x40xbf16>, vector<40x128xbf16>, vector<256x128xf32> -> vector<256x128xf32>
    %c0_3 = arith.constant 0 : index
    %c0_4 = arith.constant 0 : index
    %3 = vector.load %arg4[%c0_3, %c0_4] : memref<8x128xf32, #tpu.memory_space<vmem>>, vector<1x128xf32>
    %4 = vector.broadcast %3 : vector<1x128xf32> to vector<256x128xf32>
    %5 = arith.addf %2, %4 : vector<256x128xf32>
    %cst_5 = arith.constant 0.000000e+00 : f32
    %6 = vector.broadcast %cst_5 : f32 to vector<256x128xf32>
    %7 = arith.maximumf %5, %6 : vector<256x128xf32>
    %cst_6 = arith.constant dense<0.000000e+00> : vector<128xf32>
    %8 = vector.multi_reduction <add>, %7, %cst_6 [0] : vector<256x128xf32> to vector<128xf32>
    %9 = vector.shape_cast %8 : vector<128xf32> to vector<1x128xf32>
    %cst_7 = arith.constant 3.906250e-03 : f32
    %10 = vector.broadcast %cst_7 : f32 to vector<1x128xf32>
    %11 = arith.mulf %9, %10 : vector<1x128xf32>
    %12 = arith.index_cast %arg0 : i32 to index
    %c0_8 = arith.constant 0 : index
    %13 = vector.load %arg6[%12, %c0_8] : memref<2x128xf32, #tpu.memory_space<vmem>>, vector<1x128xf32>
    tpu.vector_store %arg6[%12, %c0_8], %11 {strides = array<i32>} : memref<2x128xf32, #tpu.memory_space<vmem>>, vector<1x128xf32>,
    %c1_i32 = arith.constant 1 : i32
    %14 = arith.cmpi eq, %arg0, %c1_i32 : i32
    %15 = arith.extui %14 : i1 to i32
    %c0_i32 = arith.constant 0 : i32
    %16 = arith.cmpi ne, %15, %c0_i32 : i32
    scf.if %16 {
      %c0_9 = arith.constant 0 : index
      %c0_10 = arith.constant 0 : index
      %17 = vector.load %arg6[%c0_9, %c0_10] : memref<2x128xf32, #tpu.memory_space<vmem>>, vector<2x128xf32>
      %c0_11 = arith.constant 0 : index
      %c0_12 = arith.constant 0 : index
      %18 = vector.load %arg3[%c0_11, %c0_12] : memref<240x128xf32, #tpu.memory_space<vmem>>, vector<128x64xf32>
      %cst_13 = arith.constant dense<0.000000e+00> : vector<2x64xf32>
      %19 = tpu.matmul %17, %18, %cst_13 {dimension_numbers = #tpu.dot_dimension_numbers<[1], [0], [0], [1], [0, 0, 1, 1], [], []>} : vector<2x128xf32>, vector<128x64xf32>, vector<2x64xf32> -> vector<2x64xf32>
      %cst_14 = arith.constant dense<0.000000e+00> : vector<64xf32>
      %20 = vector.multi_reduction <add>, %19, %cst_14 [0] : vector<2x64xf32> to vector<64xf32>
      %21 = vector.shape_cast %20 : vector<64xf32> to vector<1x64xf32>
      %cst_15 = arith.constant 2.000000e+00 : f32
      %22 = vector.broadcast %cst_15 : f32 to vector<1x64xf32>
      %23 = arith.divf %21, %22 : vector<1x64xf32>
      %24 = vector.broadcast %23 : vector<1x64xf32> to vector<2x64xf32>
      %25 = arith.subf %19, %24 : vector<2x64xf32>
      %26 = arith.mulf %25, %25 : vector<2x64xf32>
      %cst_16 = arith.constant dense<0.000000e+00> : vector<64xf32>
      %27 = vector.multi_reduction <add>, %26, %cst_16 [0] : vector<2x64xf32> to vector<64xf32>
      %28 = vector.shape_cast %27 : vector<64xf32> to vector<1x64xf32>
      %cst_17 = arith.constant 2.000000e+00 : f32
      %29 = vector.broadcast %cst_17 : f32 to vector<1x64xf32>
      %30 = arith.divf %28, %29 : vector<1x64xf32>
      %31 = vector.broadcast %23 : vector<1x64xf32> to vector<2x64xf32>
      %32 = arith.subf %19, %31 : vector<2x64xf32>
      %cst_18 = arith.constant 9.99999974E-6 : f32
      %33 = vector.broadcast %cst_18 : f32 to vector<1x64xf32>
      %34 = arith.addf %30, %33 : vector<1x64xf32>
      %35 = math.rsqrt %34 : vector<1x64xf32>
      %36 = vector.broadcast %35 : vector<1x64xf32> to vector<2x64xf32>
      %37 = arith.mulf %32, %36 : vector<2x64xf32>
      %c1 = arith.constant 1 : index
      %c0_19 = arith.constant 0 : index
      %38 = vector.load %arg4[%c1, %c0_19] : memref<8x128xf32, #tpu.memory_space<vmem>>, vector<1x64xf32>
      %39 = vector.broadcast %38 : vector<1x64xf32> to vector<2x64xf32>
      %40 = arith.mulf %37, %39 : vector<2x64xf32>
      %c2 = arith.constant 2 : index
      %c0_20 = arith.constant 0 : index
      %41 = vector.load %arg4[%c2, %c0_20] : memref<8x128xf32, #tpu.memory_space<vmem>>, vector<1x64xf32>
      %42 = vector.broadcast %41 : vector<1x64xf32> to vector<2x64xf32>
      %43 = arith.addf %40, %42 : vector<2x64xf32>
      %cst_21 = arith.constant 0.000000e+00 : f32
      %44 = vector.broadcast %cst_21 : f32 to vector<2x64xf32>
      %45 = arith.maximumf %43, %44 : vector<2x64xf32>
      %c128 = arith.constant 128 : index
      %c0_22 = arith.constant 0 : index
      %46 = vector.load %arg3[%c128, %c0_22] : memref<240x128xf32, #tpu.memory_space<vmem>>, vector<64x16xf32>
      %cst_23 = arith.constant dense<0.000000e+00> : vector<2x16xf32>
      %47 = tpu.matmul %45, %46, %cst_23 {dimension_numbers = #tpu.dot_dimension_numbers<[1], [0], [0], [1], [0, 0, 1, 1], [], []>} : vector<2x64xf32>, vector<64x16xf32>, vector<2x16xf32> -> vector<2x16xf32>
      %c3 = arith.constant 3 : index
      %c0_24 = arith.constant 0 : index
      %48 = vector.load %arg4[%c3, %c0_24] : memref<8x128xf32, #tpu.memory_space<vmem>>, vector<1x16xf32>
      %49 = vector.broadcast %48 : vector<1x16xf32> to vector<2x16xf32>
      %50 = arith.addf %47, %49 : vector<2x16xf32>
      %c192 = arith.constant 192 : index
      %c0_25 = arith.constant 0 : index
      %51 = vector.load %arg3[%c192, %c0_25] : memref<240x128xf32, #tpu.memory_space<vmem>>, vector<16x32xf32>
      %cst_26 = arith.constant dense<0.000000e+00> : vector<2x32xf32>
      %52 = tpu.matmul %50, %51, %cst_26 {dimension_numbers = #tpu.dot_dimension_numbers<[1], [0], [0], [1], [0, 0, 1, 1], [], []>} : vector<2x16xf32>, vector<16x32xf32>, vector<2x32xf32> -> vector<2x32xf32>
      %cst_27 = arith.constant dense<0.000000e+00> : vector<32xf32>
      %53 = vector.multi_reduction <add>, %52, %cst_27 [0] : vector<2x32xf32> to vector<32xf32>
      %54 = vector.shape_cast %53 : vector<32xf32> to vector<1x32xf32>
      %cst_28 = arith.constant 2.000000e+00 : f32
      %55 = vector.broadcast %cst_28 : f32 to vector<1x32xf32>
      %56 = arith.divf %54, %55 : vector<1x32xf32>
      %57 = vector.broadcast %56 : vector<1x32xf32> to vector<2x32xf32>
      %58 = arith.subf %52, %57 : vector<2x32xf32>
      %59 = arith.mulf %58, %58 : vector<2x32xf32>
      %cst_29 = arith.constant dense<0.000000e+00> : vector<32xf32>
      %60 = vector.multi_reduction <add>, %59, %cst_29 [0] : vector<2x32xf32> to vector<32xf32>
      %61 = vector.shape_cast %60 : vector<32xf32> to vector<1x32xf32>
      %cst_30 = arith.constant 2.000000e+00 : f32
      %62 = vector.broadcast %cst_30 : f32 to vector<1x32xf32>
      %63 = arith.divf %61, %62 : vector<1x32xf32>
      %64 = vector.broadcast %56 : vector<1x32xf32> to vector<2x32xf32>
      %65 = arith.subf %52, %64 : vector<2x32xf32>
      %cst_31 = arith.constant 9.99999974E-6 : f32
      %66 = vector.broadcast %cst_31 : f32 to vector<1x32xf32>
      %67 = arith.addf %63, %66 : vector<1x32xf32>
      %68 = math.rsqrt %67 : vector<1x32xf32>
      %69 = vector.broadcast %68 : vector<1x32xf32> to vector<2x32xf32>
      %70 = arith.mulf %65, %69 : vector<2x32xf32>
      %c4 = arith.constant 4 : index
      %c0_32 = arith.constant 0 : index
      %71 = vector.load %arg4[%c4, %c0_32] : memref<8x128xf32, #tpu.memory_space<vmem>>, vector<1x32xf32>
      %72 = vector.broadcast %71 : vector<1x32xf32> to vector<2x32xf32>
      %73 = arith.mulf %70, %72 : vector<2x32xf32>
      %c5 = arith.constant 5 : index
      %c0_33 = arith.constant 0 : index
      %74 = vector.load %arg4[%c5, %c0_33] : memref<8x128xf32, #tpu.memory_space<vmem>>, vector<1x32xf32>
      %75 = vector.broadcast %74 : vector<1x32xf32> to vector<2x32xf32>
      %76 = arith.addf %73, %75 : vector<2x32xf32>
      %cst_34 = arith.constant 0.000000e+00 : f32
      %77 = vector.broadcast %cst_34 : f32 to vector<2x32xf32>
      %78 = arith.maximumf %76, %77 : vector<2x32xf32>
      %c208 = arith.constant 208 : index
      %c0_35 = arith.constant 0 : index
      %79 = vector.load %arg3[%c208, %c0_35] : memref<240x128xf32, #tpu.memory_space<vmem>>, vector<32x16xf32>
      %cst_36 = arith.constant dense<0.000000e+00> : vector<2x16xf32>
      %80 = tpu.matmul %78, %79, %cst_36 {dimension_numbers = #tpu.dot_dimension_numbers<[1], [0], [0], [1], [0, 0, 1, 1], [], []>} : vector<2x32xf32>, vector<32x16xf32>, vector<2x16xf32> -> vector<2x16xf32>
      %c6 = arith.constant 6 : index
      %c0_37 = arith.constant 0 : index
      %81 = vector.load %arg4[%c6, %c0_37] : memref<8x128xf32, #tpu.memory_space<vmem>>, vector<1x16xf32>
      %82 = vector.broadcast %81 : vector<1x16xf32> to vector<2x16xf32>
      %83 = arith.addf %80, %82 : vector<2x16xf32>
      %c0_38 = arith.constant 0 : index
      %c0_39 = arith.constant 0 : index
      %84 = vector.load %arg5[%c0_38, %c0_39] : memref<2x16xf32, #tpu.memory_space<vmem>>, vector<2x16xf32>
      tpu.vector_store %arg5[%c0_38, %c0_39], %83 {strides = array<i32>} : memref<2x16xf32, #tpu.memory_space<vmem>>, vector<2x16xf32>,
    } else {
    }
    return
  }
  func.func @transform_0(%arg0: i32) -> (i32, i32) {
    %c0_i32 = arith.constant 0 : i32
    %c0_i32_0 = arith.constant 0 : i32
    return %arg0, %c0_i32 : i32, i32
  }
  func.func @transform_1(%arg0: i32) -> (i32, i32) {
    %c0_i32 = arith.constant 0 : i32
    %c0_i32_0 = arith.constant 0 : i32
    %c0_i32_1 = arith.constant 0 : i32
    return %c0_i32, %c0_i32_0 : i32, i32
  }
  func.func @transform_2(%arg0: i32) -> (i32, i32) {
    %c0_i32 = arith.constant 0 : i32
    %c0_i32_0 = arith.constant 0 : i32
    %c0_i32_1 = arith.constant 0 : i32
    return %c0_i32, %c0_i32_0 : i32, i32
  }
  func.func @transform_3(%arg0: i32) -> (i32, i32) {
    %c0_i32 = arith.constant 0 : i32
    %c0_i32_0 = arith.constant 0 : i32
    %c0_i32_1 = arith.constant 0 : i32
    return %c0_i32, %c0_i32_0 : i32, i32
  }
  func.func @transform_4(%arg0: i32) -> (i32, i32) {
    %c0_i32 = arith.constant 0 : i32
    %c0_i32_0 = arith.constant 0 : i32
    %c0_i32_1 = arith.constant 0 : i32
    return %c0_i32, %c0_i32_0 : i32, i32
  }
}

</mosaic_0001>

<llo_original>
// kernel: byol_forward_pallas.1
$region0: #{byol_forward_pallas.1}
  #allocation0 [shape = 'u32[]', space=smem, size = 0x4, offset = 0x4, fixed_abs, tag = 'smem constant byte address 0x4 - core index']
  #allocation1 [shape = 'u32[144,128]{1,0:T(1,128)}', space=vmem, size = 0x12000, scoped, tag = 'internal scratch']
  #allocation2 [shape = 'f32[2,128]{1,0:T(2,128)}', space=vmem, size = 0x400, scoped, tag = 'scratch operand']
  %s0 = inlined_call_operand.vmem [shape: bf16[512,40], index: 0, kind: input, shape index: {}]
  %s1 = inlined_call_operand.vmem [shape: bf16[40,128], index: 1, kind: input, shape index: {}]
  %s2 = inlined_call_operand.vmem [shape: f32[240,128], index: 2, kind: input, shape index: {}]
  %s3 = inlined_call_operand.vmem [shape: f32[8,128], index: 3, kind: input, shape index: {}]
  %s4 = inlined_call_operand.hbm [shape: f32[2,16], index: 4, kind: output, shape index: {}]
  %s5 = sld [smem:[#allocation0]]
  $region53: #{byol_forward_pallas.1} parent=0
    _
  %s7 = ssub.s32 1, %s5
  %s8 = scalar_select 0, %s7, %s5
  $region1: #{byol_forward_pallas.1} parent=0
    #allocation3 [shape = 'u8[1024]{0}', space=vmem, size = 0x400, scoped, tag = 'output window, operand 0, single buffered']
    #allocation4 [shape = 's32[2]{0}', space=sflag, size = 0x8, scoped, tag = 'scoped memory for byol_forward_pallas.1']
    %9 = vsyncpa [#allocation4], 0
    loop: start=0, step=1, limit=4
    $region2: #{byol_forward_pallas.1} parent=1 // loop_pre_header
      _
    $region3: #{byol_forward_pallas.1} parent=1 // loop_header
      %s11 = sphi 0, %s15
      %p12 = scmp.ge.s32.totalorder %s11, 4
      %s21 = sphi 0, %s23
      %s24 = sphi 0, %s21
      %s25 = sphi 0, %s24
      %s41 = sphi 0, %s25
      %s45 = sphi 0, %s45
      %s47 = sphi 0, %s45
      %s48 = sphi 0, %s47
      %s62 = sphi 0, %s48
      %s66 = sphi 0, %s66
      %s68 = sphi 0, %s66
      %s69 = sphi 0, %s68
      %s83 = sphi 0, %s69
      %s87 = sphi 0, %s87
      %s89 = sphi 0, %s87
      %s90 = sphi 0, %s89
      %s104 = sphi 0, %s90
      %s108 = sphi 0, %s108
      %s110 = sphi 0, %s108
      %s111 = sphi 0, %s110
      %s125 = sphi 0, %s111
    $region4: #{byol_forward_pallas.1} parent=1 // loop_header_branch
      %14 = sbr.rel (%p12) target = $region8
    $region5: #{byol_forward_pallas.1} parent=1 // loop_body
      %s16 = ssub.s32 %s11, 1
      %s17 = ssub.s32 %s11, 2
      %s18 = sadd.s32 %s11, 1
      %s19 = ssub.s32 %s11, %s18
      %p20 = scmp.eq.s32.totalorder %s19, 0
      %s22 = sadd.s32 %s21, 1
      %s23 = scalar_select %p20, %s21, %s22
      %p26 = pneg %p20
      %p27 = scmp.eq.s32.totalorder %s11, 1
      %p28 = por %p26, %p27
      %p29 = scmp.ne.s32.totalorder %s21, %s24
      %p30 = scmp.eq.s32.totalorder %s11, 0
      %p31 = por %p29, %p30
      %p32 = scmp.ne.s32.totalorder %s21, %s24
      %p33 = scmp.eq.s32.totalorder %s16, 1
      %p34 = por %p32, %p33
      %p35 = scmp.ne.s32.totalorder %s24, %s25
      %p36 = scmp.eq.s32.totalorder %s16, 0
      %p37 = por %p35, %p36
      %p38 = scmp.ne.s32.totalorder %s24, %s25
      %p39 = scmp.eq.s32.totalorder %s17, 1
      %p40 = por %p38, %p39
      %p42 = scmp.ne.s32.totalorder %s25, %s41
      %p43 = scmp.eq.s32.totalorder %s17, 0
      %p44 = por %p42, %p43
      %s46 = sadd.s32 %s45, 1
      %p49 = scmp.eq.s32.totalorder %s11, 1
      %p50 = scmp.ne.s32.totalorder %s45, %s47
      %p51 = scmp.eq.s32.totalorder %s11, 0
      %p52 = por %p50, %p51
      %p53 = scmp.ne.s32.totalorder %s45, %s47
      %p54 = scmp.eq.s32.totalorder %s16, 1
      %p55 = por %p53, %p54
      %p56 = scmp.ne.s32.totalorder %s47, %s48
      %p57 = scmp.eq.s32.totalorder %s16, 0
      %p58 = por %p56, %p57
      %p59 = scmp.ne.s32.totalorder %s47, %s48
      %p60 = scmp.eq.s32.totalorder %s17, 1
      %p61 = por %p59, %p60
      %p63 = scmp.ne.s32.totalorder %s48, %s62
      %p64 = scmp.eq.s32.totalorder %s17, 0
      %p65 = por %p63, %p64
      %s67 = sadd.s32 %s66, 1
      %p70 = scmp.eq.s32.totalorder %s11, 1
      %p71 = scmp.ne.s32.totalorder %s66, %s68
      %p72 = scmp.eq.s32.totalorder %s11, 0
      %p73 = por %p71, %p72
      %p74 = scmp.ne.s32.totalorder %s66, %s68
      %p75 = scmp.eq.s32.totalorder %s16, 1
      %p76 = por %p74, %p75
      %p77 = scmp.ne.s32.totalorder %s68, %s69
      %p78 = scmp.eq.s32.totalorder %s16, 0
      %p79 = por %p77, %p78
      %p80 = scmp.ne.s32.totalorder %s68, %s69
      %p81 = scmp.eq.s32.totalorder %s17, 1
      %p82 = por %p80, %p81
      %p84 = scmp.ne.s32.totalorder %s69, %s83
      %p85 = scmp.eq.s32.totalorder %s17, 0
      %p86 = por %p84, %p85
      %s88 = sadd.s32 %s87, 1
      %p91 = scmp.eq.s32.totalorder %s11, 1
      %p92 = scmp.ne.s32.totalorder %s87, %s89
      %p93 = scmp.eq.s32.totalorder %s11, 0
      %p94 = por %p92, %p93
      %p95 = scmp.ne.s32.totalorder %s87, %s89
      %p96 = scmp.eq.s32.totalorder %s16, 1
      %p97 = por %p95, %p96
      %p98 = scmp.ne.s32.totalorder %s89, %s90
      %p99 = scmp.eq.s32.totalorder %s16, 0
      %p100 = por %p98, %p99
      %p101 = scmp.ne.s32.totalorder %s89, %s90
      %p102 = scmp.eq.s32.totalorder %s17, 1
      %p103 = por %p101, %p102
      %p105 = scmp.ne.s32.totalorder %s90, %s104
      %p106 = scmp.eq.s32.totalorder %s17, 0
      %p107 = por %p105, %p106
      %s109 = sadd.s32 %s108, 1
      %p112 = scmp.eq.s32.totalorder %s11, 1
      %p113 = scmp.ne.s32.totalorder %s108, %s110
      %p114 = scmp.eq.s32.totalorder %s11, 0
      %p115 = por %p113, %p114
      %p116 = scmp.ne.s32.totalorder %s108, %s110
      %p117 = scmp.eq.s32.totalorder %s16, 1
      %p118 = por %p116, %p117
      %p119 = scmp.ne.s32.totalorder %s110, %s111
      %p120 = scmp.eq.s32.totalorder %s16, 0
      %p121 = por %p119, %p120
      %p122 = scmp.ne.s32.totalorder %s110, %s111
      %p123 = scmp.eq.s32.totalorder %s17, 1
      %p124 = por %p122, %p123
      %p126 = scmp.ne.s32.totalorder %s111, %s125
      %p127 = scmp.eq.s32.totalorder %s17, 0
      %p128 = por %p126, %p127
      %p129 = scmp.le.s32.totalorder 1, %s11
      %p130 = scmp.lt.s32.totalorder %s11, 3
      %p131 = pnand %p129, %p130
      %p132 = pneg %p131
      // Predicated region
      $region9: #{byol_forward_pallas.1} parent=5 // pred_check
        _
      $region10: #{byol_forward_pallas.1} parent=5 // pred_check_branch
        %134 = sbr.rel (%p131) target = $region12
      $region11: #{byol_forward_pallas.1} parent=5 // pred_region
        %s135 = ssub.s32 %s11, 1
        // Predicated region
        $region13: #{byol_forward_pallas.1} parent=11 // pred_check
          %p136 = pneg %p58
        $region14: #{byol_forward_pallas.1} parent=11 // pred_check_branch
          %138 = sbr.rel (%p136) target = $region16
        $region15: #{byol_forward_pallas.1} parent=11 // pred_region
          _
        $region16: #{byol_forward_pallas.1} parent=11 // pred_fallthru
          _
        // Predicated region
        $region17: #{byol_forward_pallas.1} parent=11 // pred_check
          %p139 = pneg %p79
        $region18: #{byol_forward_pallas.1} parent=11 // pred_check_branch
          %141 = sbr.rel (%p139) target = $region20
        $region19: #{byol_forward_pallas.1} parent=11 // pred_region
          _
        $region20: #{byol_forward_pallas.1} parent=11 // pred_fallthru
          _
        // Predicated region
        $region21: #{byol_forward_pallas.1} parent=11 // pred_check
          %p142 = pneg %p100
        $region22: #{byol_forward_pallas.1} parent=11 // pred_check_branch
          %144 = sbr.rel (%p142) target = $region24
        $region23: #{byol_forward_pallas.1} parent=11 // pred_region
          _
        $region24: #{byol_forward_pallas.1} parent=11 // pred_fallthru
          _
      $region12: #{byol_forward_pallas.1} parent=5 // pred_fallthru
        _
      %p145 = scmp.lt.s32.totalorder %s11, 2
      // Predicated region
      $region25: #{byol_forward_pallas.1} parent=5 // pred_check
        %p146 = pneg %p145
      $region26: #{byol_forward_pallas.1} parent=5 // pred_check_branch
        %148 = sbr.rel (%p146) target = $region28
      $region27: #{byol_forward_pallas.1} parent=5 // pred_region
        // Predicated region
        $region29: #{byol_forward_pallas.1} parent=27 // pred_check
          %p149 = pneg %p31
        $region30: #{byol_forward_pallas.1} parent=27 // pred_check_branch
          %151 = sbr.rel (%p149) target = $region32
        $region31: #{byol_forward_pallas.1} parent=27 // pred_region
          %s152 = smul.u32 32, %s11
          %p153 = scmp.lt.s32.totalorder %s152, 63
          %s154 = scalar_select %p153, %s152, 63
          %s155 = smul.addr %s154, 4
          %s156 = scalar_lea.vmem %s0, %s155
          %s157 = smul.u32 32, %s11
        $region32: #{byol_forward_pallas.1} parent=27 // pred_fallthru
          _
      $region28: #{byol_forward_pallas.1} parent=5 // pred_fallthru
        _
      %p158 = scmp.le.s32.totalorder 1, %s11
      %p159 = scmp.lt.s32.totalorder %s11, 3
      %p160 = pnand %p158, %p159
      %p161 = pneg %p160
      // Predicated region
      $region33: #{byol_forward_pallas.1} parent=5 // pred_check
        _
      $region34: #{byol_forward_pallas.1} parent=5 // pred_check_branch
        %163 = sbr.rel (%p160) target = $region36
      $region35: #{byol_forward_pallas.1} parent=5 // pred_region
        %s164 = ssub.s32 %s11, 1
        %s165 = smul.u32 32, %s16
        %p166 = scmp.lt.s32.totalorder %s165, 63
        %s167 = scalar_select %p166, %s165, 63
        %s168 = smul.addr %s167, 4
        %s169 = scalar_lea.vmem %s0, %s168
        %p170 = pneg %p37
        %p171 = pneg %p34
        %p172 = pneg %p58
        %p173 = pneg %p55
        %p174 = pneg %p79
        %p175 = pneg %p76
        %p176 = pneg %p100
        %p177 = pneg %p97
        %p178 = pneg %p121
        %p179 = pneg %p118
        %s180 = smul.u32 32, %s16
        %p181 = scmp.lt.s32.totalorder %s180, 63
        %s182 = scalar_select %p181, %s180, 63
        %s183 = smul.addr %s182, 4
        %s184 = scalar_lea.vmem %s0, %s183
        %s185 = smul.u32 32, %s16
        %v187 = vld [vmem:[%s184] sm:$0xf]
        %v188 = vld [vmem:[%s184 + $0x4] sm:$0xf]
        %v189 = vld [vmem:[%s184 + $0x8] sm:$0xf]
        %v190 = vld [vmem:[%s184 + $0xc] sm:$0xf]
        %v191 = vld [vmem:[%s184 + $0x10] sm:$0xf]
        %v192 = vld [vmem:[%s184 + $0x14] sm:$0xf]
        %v193 = vld [vmem:[%s184 + $0x18] sm:$0xf]
        %v194 = vld [vmem:[%s184 + $0x1c] sm:$0xf]
        %v195 = vld [vmem:[%s184 + $0x20] sm:$0xf]
        %v196 = vld [vmem:[%s184 + $0x24] sm:$0xf]
        %v197 = vld [vmem:[%s184 + $0x28] sm:$0xf]
        %v198 = vld [vmem:[%s184 + $0x2c] sm:$0xf]
        %v199 = vld [vmem:[%s184 + $0x30] sm:$0xf]
        %v200 = vld [vmem:[%s184 + $0x34] sm:$0xf]
        %v201 = vld [vmem:[%s184 + $0x38] sm:$0xf]
        %v202 = vld [vmem:[%s184 + $0x3c] sm:$0xf]
        %v203 = vld [vmem:[%s184 + $0x40] sm:$0xf]
        %v204 = vld [vmem:[%s184 + $0x44] sm:$0xf]
        %v205 = vld [vmem:[%s184 + $0x48] sm:$0xf]
        %v206 = vld [vmem:[%s184 + $0x4c] sm:$0xf]
        %v207 = vld [vmem:[%s184 + $0x50] sm:$0xf]
        %v208 = vld [vmem:[%s184 + $0x54] sm:$0xf]
        %v209 = vld [vmem:[%s184 + $0x58] sm:$0xf]
        %v210 = vld [vmem:[%s184 + $0x5c] sm:$0xf]
        %v211 = vld [vmem:[%s184 + $0x60] sm:$0xf]
        %v212 = vld [vmem:[%s184 + $0x64] sm:$0xf]
        %v213 = vld [vmem:[%s184 + $0x68] sm:$0xf]
        %v214 = vld [vmem:[%s184 + $0x6c] sm:$0xf]
        %v215 = vld [vmem:[%s184 + $0x70] sm:$0xf]
        %v216 = vld [vmem:[%s184 + $0x74] sm:$0xf]
        %v217 = vld [vmem:[%s184 + $0x78] sm:$0xf]
        %v218 = vld [vmem:[%s184 + $0x7c] sm:$0xf]
        %v219 = vld [vmem:[%s1] sm:$0xf]
        %v220 = vld [vmem:[%s1 + $0x4] sm:$0xf]
        %v221 = vld [vmem:[%s1 + $0x8] sm:$0xf]
        %v222 = vld [vmem:[%s1 + $0xc] sm:$0xf]
        %v223 = vld [vmem:[%s1 + $0x10] sm:$0xf]
        %v224 = vld [vmem:[%s3] sm:$0x1]
        %v225 = vlaneseq
        %v226 = vshrl.u32 %v225, 7
        %v227 = vsub.s32 0, %v226
        %v228 = vrot.slane %v224, %v227
        %v261 = vunpack.c.l.b16 %v187
        %v262 = vunpack.c.l.b16 %v188
        %v263 = vunpack.c.l.b16 %v189
        %v264 = vunpack.c.l.b16 %v190
        %v265 = vunpack.c.l.b16 %v191
        %v266 = vunpack.c.l.b16 %v192
        %v267 = vunpack.c.l.b16 %v193
        %v268 = vunpack.c.l.b16 %v194
        %v269 = vunpack.c.l.b16 %v195
        %v270 = vunpack.c.l.b16 %v196
        %v271 = vunpack.c.l.b16 %v197
        %v272 = vunpack.c.l.b16 %v198
        %v273 = vunpack.c.l.b16 %v199
        %v274 = vunpack.c.l.b16 %v200
        %v275 = vunpack.c.l.b16 %v201
        %v276 = vunpack.c.l.b16 %v202
        %v277 = vunpack.c.l.b16 %v203
        %v278 = vunpack.c.l.b16 %v204
        %v279 = vunpack.c.l.b16 %v205
        %v280 = vunpack.c.l.b16 %v206
        %v281 = vunpack.c.l.b16 %v207
        %v282 = vunpack.c.l.b16 %v208
        %v283 = vunpack.c.l.b16 %v209
        %v284 = vunpack.c.l.b16 %v210
        %v285 = vunpack.c.l.b16 %v211
        %v286 = vunpack.c.l.b16 %v212
        %v287 = vunpack.c.l.b16 %v213
        %v288 = vunpack.c.l.b16 %v214
        %v289 = vunpack.c.l.b16 %v215
        %v290 = vunpack.c.l.b16 %v216
        %v291 = vunpack.c.l.b16 %v217
        %v292 = vunpack.c.l.b16 %v218
        %v293 = vpack.c.b16 %v262, %v261
        %v294 = vpack.c.b16 %v264, %v263
        %v295 = vpack.c.b16 %v266, %v265
        %v296 = vpack.c.b16 %v268, %v267
        %v297 = vpack.c.b16 %v270, %v269
        %v298 = vpack.c.b16 %v272, %v271
        %v299 = vpack.c.b16 %v274, %v273
        %v300 = vpack.c.b16 %v276, %v275
        %v301 = vpack.c.b16 %v278, %v277
        %v302 = vpack.c.b16 %v280, %v279
        %v303 = vpack.c.b16 %v282, %v281
        %v304 = vpack.c.b16 %v284, %v283
        %v305 = vpack.c.b16 %v286, %v285
        %v306 = vpack.c.b16 %v288, %v287
        %v307 = vpack.c.b16 %v290, %v289
        %v308 = vpack.c.b16 %v292, %v291
        %v314 = vunpack.c.l.b16 %v219
        %v315 = vunpack.c.l.b16 %v220
        %v316 = vunpack.c.l.b16 %v221
        %v317 = vunpack.c.l.b16 %v222
        %v318 = vunpack.c.l.b16 %v223
        %v319 = vpack.c.b16 %v315, %v314
        %v320 = vpack.c.b16 %v317, %v316
        %v321 = vpack.c.b16 %v318, %v318
        %vm324 = vcmask 326656
        %v326 = vsel %vm324, %v293, 0
        %v329 = vsel %vm324, %v294, 0
        %v332 = vsel %vm324, %v295, 0
        %v335 = vsel %vm324, %v296, 0
        %v338 = vsel %vm324, %v297, 0
        %v341 = vsel %vm324, %v298, 0
        %v344 = vsel %vm324, %v299, 0
        %v347 = vsel %vm324, %v300, 0
        %v350 = vsel %vm324, %v301, 0
        %v353 = vsel %vm324, %v302, 0
        %v356 = vsel %vm324, %v303, 0
        %v359 = vsel %vm324, %v304, 0
        %v362 = vsel %vm324, %v305, 0
        %v365 = vsel %vm324, %v306, 0
        %v368 = vsel %vm324, %v307, 0
        %v371 = vsel %vm324, %v308, 0
        %vm373 = vcmask 1043456
        %v375 = vsel %vm373, %v321, 0
        %377 = vmatprep.subr.bf16.mxu0 0
        %378 = vmatpush1.bf16.msra.mxu0 %v319
        %379 = vmatprep.subr.bf16.mxu0 0
        %380 = vmatpush1.bf16.msra.mxu0 %v320
        %381 = vmatprep.subr.bf16.mxu0 0
        %382 = vmatpush1.bf16.msra.mxu0 %v375
        %383 = vmatprep.subr.bf16.mxu0 0
        %384 = vmatpush1.bf16.msra.mxu0 0
        %385 = vmatprep.subr.bf16.mxu0 0
        %386 = vmatpush1.bf16.msra.mxu0 0
        %387 = vmatprep.subr.bf16.mxu0 0
        %388 = vmatpush1.bf16.msra.mxu0 0
        %389 = vmatprep.subr.bf16.mxu0 0
        %390 = vmatpush1.bf16.msra.mxu0 0
        %391 = vmatprep.subr.bf16.mxu0 0
        %392 = vmatpush1.bf16.msra.mxu0 0
        %393 = vmatprep.subr.bf16.mxu0 0
        %394 = vmatpush1.bf16.msra.mxu0 0
        %395 = vmatprep.subr.bf16.mxu0 0
        %396 = vmatpush1.bf16.msra.mxu0 0
        %397 = vmatprep.subr.bf16.mxu0 0
        %398 = vmatpush1.bf16.msra.mxu0 0
        %399 = vmatprep.subr.bf16.mxu0 0
        %400 = vmatpush1.bf16.msra.mxu0 0
        %401 = vmatprep.subr.bf16.mxu0 0
        %402 = vmatpush1.bf16.msra.mxu0 0
        %403 = vmatprep.subr.bf16.mxu0 0
        %404 = vmatpush1.bf16.msra.mxu0 0
        %405 = vmatprep.subr.bf16.mxu0 0
        %406 = vmatpush1.bf16.msra.mxu0 0
        %407 = vmatprep.subr.bf16.mxu0 0
        %408 = vmatpush1.bf16.msra.mxu0 0
        %409 = vmatprep.mubr.bf16.mxu0 0
        %410 = vmatmul.mubr.bf16.gmra.mrb[0].mxu0 %v326
        %v411 = vpop.f32.mrb[0].mxu0
        %v412 = vadd.f32 %v228, %v411
        %v413 = vpop.f32.mrb[0].mxu0
        %v414 = vpop.f32.mrb[0].mxu0
        %v415 = vadd.f32 %v228, %v414
        %v416 = vpop.f32.mrb[0].mxu0
        %417 = vmatprep.mubr.bf16.mxu0 0
        %418 = vmatmul.mubr.bf16.gmra.mrb[0].mxu0 %v329
        %v419 = vpop.f32.mrb[0].mxu0
        %v420 = vadd.f32 %v228, %v419
        %v421 = vpop.f32.mrb[0].mxu0
        %v422 = vpop.f32.mrb[0].mxu0
        %v423 = vadd.f32 %v228, %v422
        %v424 = vpop.f32.mrb[0].mxu0
        %425 = vmatprep.mubr.bf16.mxu0 0
        %426 = vmatmul.mubr.bf16.gmra.mrb[0].mxu0 %v332
        %v427 = vpop.f32.mrb[0].mxu0
        %v428 = vadd.f32 %v228, %v427
        %v429 = vpop.f32.mrb[0].mxu0
        %v430 = vpop.f32.mrb[0].mxu0
        %v431 = vadd.f32 %v228, %v430
        %v432 = vpop.f32.mrb[0].mxu0
        %433 = vmatprep.mubr.bf16.mxu0 0
        %434 = vmatmul.mubr.bf16.gmra.mrb[0].mxu0 %v335
        %v435 = vpop.f32.mrb[0].mxu0
        %v436 = vadd.f32 %v228, %v435
        %v437 = vpop.f32.mrb[0].mxu0
        %v438 = vpop.f32.mrb[0].mxu0
        %v439 = vadd.f32 %v228, %v438
        %v440 = vpop.f32.mrb[0].mxu0
        %441 = vmatprep.mubr.bf16.mxu0 0
        %442 = vmatmul.mubr.bf16.gmra.mrb[0].mxu0 %v338
        %v443 = vpop.f32.mrb[0].mxu0
        %v444 = vadd.f32 %v228, %v443
        %v445 = vpop.f32.mrb[0].mxu0
        %v446 = vpop.f32.mrb[0].mxu0
        %v447 = vadd.f32 %v228, %v446
        %v448 = vpop.f32.mrb[0].mxu0
        %449 = vmatprep.mubr.bf16.mxu0 0
        %450 = vmatmul.mubr.bf16.gmra.mrb[0].mxu0 %v341
        %v451 = vpop.f32.mrb[0].mxu0
        %v452 = vadd.f32 %v228, %v451
        %v453 = vpop.f32.mrb[0].mxu0
        %v454 = vpop.f32.mrb[0].mxu0
        %v455 = vadd.f32 %v228, %v454
        %v456 = vpop.f32.mrb[0].mxu0
        %457 = vmatprep.mubr.bf16.mxu0 0
        %458 = vmatmul.mubr.bf16.gmra.mrb[0].mxu0 %v344
        %v459 = vpop.f32.mrb[0].mxu0
        %v460 = vadd.f32 %v228, %v459
        %v461 = vpop.f32.mrb[0].mxu0
        %v462 = vpop.f32.mrb[0].mxu0
        %v463 = vadd.f32 %v228, %v462
        %v464 = vpop.f32.mrb[0].mxu0
        %465 = vmatprep.mubr.bf16.mxu0 0
        %466 = vmatmul.mubr.bf16.gmra.mrb[0].mxu0 %v347
        %v467 = vpop.f32.mrb[0].mxu0
        %v468 = vadd.f32 %v228, %v467
        %v469 = vpop.f32.mrb[0].mxu0
        %v470 = vpop.f32.mrb[0].mxu0
        %v471 = vadd.f32 %v228, %v470
        %v472 = vpop.f32.mrb[0].mxu0
        %473 = vmatprep.mubr.bf16.mxu0 0
        %474 = vmatmul.mubr.bf16.gmra.mrb[0].mxu0 %v350
        %v475 = vpop.f32.mrb[0].mxu0
        %v476 = vadd.f32 %v228, %v475
        %v477 = vpop.f32.mrb[0].mxu0
        %v478 = vpop.f32.mrb[0].mxu0
        %v479 = vadd.f32 %v228, %v478
        %v480 = vpop.f32.mrb[0].mxu0
        %481 = vmatprep.mubr.bf16.mxu0 0
        %482 = vmatmul.mubr.bf16.gmra.mrb[0].mxu0 %v353
        %v483 = vpop.f32.mrb[0].mxu0
        %v484 = vadd.f32 %v228, %v483
        %v485 = vpop.f32.mrb[0].mxu0
        %v486 = vpop.f32.mrb[0].mxu0
        %v487 = vadd.f32 %v228, %v486
        %v488 = vpop.f32.mrb[0].mxu0
        %489 = vmatprep.mubr.bf16.mxu0 0
        %490 = vmatmul.mubr.bf16.gmra.mrb[0].mxu0 %v356
        %v491 = vpop.f32.mrb[0].mxu0
        %v492 = vadd.f32 %v228, %v491
        %v493 = vpop.f32.mrb[0].mxu0
        %v494 = vpop.f32.mrb[0].mxu0
        %v495 = vadd.f32 %v228, %v494
        %v496 = vpop.f32.mrb[0].mxu0
        %497 = vmatprep.mubr.bf16.mxu0 0
        %498 = vmatmul.mubr.bf16.gmra.mrb[0].mxu0 %v359
        %v499 = vpop.f32.mrb[0].mxu0
        %v500 = vadd.f32 %v228, %v499
        %v501 = vpop.f32.mrb[0].mxu0
        %v502 = vpop.f32.mrb[0].mxu0
        %v503 = vadd.f32 %v228, %v502
        %v504 = vpop.f32.mrb[0].mxu0
        %505 = vmatprep.mubr.bf16.mxu0 0
        %506 = vmatmul.mubr.bf16.gmra.mrb[0].mxu0 %v362
        %v507 = vpop.f32.mrb[0].mxu0
        %v508 = vadd.f32 %v228, %v507
        %v509 = vpop.f32.mrb[0].mxu0
        %v510 = vpop.f32.mrb[0].mxu0
        %v511 = vadd.f32 %v228, %v510
        %v512 = vpop.f32.mrb[0].mxu0
        %513 = vmatprep.mubr.bf16.mxu0 0
        %514 = vmatmul.mubr.bf16.gmra.mrb[0].mxu0 %v365
        %v515 = vpop.f32.mrb[0].mxu0
        %v516 = vadd.f32 %v228, %v515
        %v517 = vpop.f32.mrb[0].mxu0
        %v518 = vpop.f32.mrb[0].mxu0
        %v519 = vadd.f32 %v228, %v518
        %v520 = vpop.f32.mrb[0].mxu0
        %521 = vmatprep.mubr.bf16.mxu0 0
        %522 = vmatmul.mubr.bf16.gmra.mrb[0].mxu0 %v368
        %v523 = vpop.f32.mrb[0].mxu0
        %v524 = vadd.f32 %v228, %v523
        %v525 = vpop.f32.mrb[0].mxu0
        %v526 = vpop.f32.mrb[0].mxu0
        %v527 = vadd.f32 %v228, %v526
        %v528 = vpop.f32.mrb[0].mxu0
        %529 = vmatprep.mubr.bf16.mxu0 0
        %530 = vmatmul.mubr.bf16.gmra.mrb[0].mxu0 %v371
        %v531 = vpop.f32.mrb[0].mxu0
        %v532 = vadd.f32 %v228, %v531
        %v533 = vpop.f32.mrb[0].mxu0
        %v534 = vpop.f32.mrb[0].mxu0
        %v535 = vadd.f32 %v228, %v534
        %v536 = vpop.f32.mrb[0].mxu0
        %537 = vdwg.mxu0
        %v538 = vmax.f32 %v412, 0.0
        %v539 = vmax.f32 %v415, 0.0
        %v540 = vmax.f32 %v420, 0.0
        %v541 = vmax.f32 %v423, 0.0
        %v542 = vmax.f32 %v428, 0.0
        %v543 = vmax.f32 %v431, 0.0
        %v544 = vmax.f32 %v436, 0.0
        %v545 = vmax.f32 %v439, 0.0
        %v546 = vmax.f32 %v444, 0.0
        %v547 = vmax.f32 %v447, 0.0
        %v548 = vmax.f32 %v452, 0.0
        %v549 = vmax.f32 %v455, 0.0
        %v550 = vmax.f32 %v460, 0.0
        %v551 = vmax.f32 %v463, 0.0
        %v552 = vmax.f32 %v468, 0.0
        %v553 = vmax.f32 %v471, 0.0
        %v554 = vmax.f32 %v476, 0.0
        %v555 = vmax.f32 %v479, 0.0
        %v556 = vmax.f32 %v484, 0.0
        %v557 = vmax.f32 %v487, 0.0
        %v558 = vmax.f32 %v492, 0.0
        %v559 = vmax.f32 %v495, 0.0
        %v560 = vmax.f32 %v500, 0.0
        %v561 = vmax.f32 %v503, 0.0
        %v562 = vmax.f32 %v508, 0.0
        %v563 = vmax.f32 %v511, 0.0
        %v564 = vmax.f32 %v516, 0.0
        %v565 = vmax.f32 %v519, 0.0
        %v566 = vmax.f32 %v524, 0.0
        %v567 = vmax.f32 %v527, 0.0
        %v568 = vmax.f32 %v532, 0.0
        %v569 = vmax.f32 %v535, 0.0
        %v570 = vadd.f32 %v538, %v539
        %v571 = vadd.f32 %v570, %v540
        %v572 = vadd.f32 %v571, %v541
        %v573 = vadd.f32 %v572, %v542
        %v574 = vadd.f32 %v573, %v543
        %v575 = vadd.f32 %v574, %v544
        %v576 = vadd.f32 %v575, %v545
        %v577 = vadd.f32 %v576, %v546
        %v578 = vadd.f32 %v577, %v547
        %v579 = vadd.f32 %v578, %v548
        %v580 = vadd.f32 %v579, %v549
        %v581 = vadd.f32 %v580, %v550
        %v582 = vadd.f32 %v581, %v551
        %v583 = vadd.f32 %v582, %v552
        %v584 = vadd.f32 %v583, %v553
        %v585 = vadd.f32 %v584, %v554
        %v586 = vadd.f32 %v585, %v555
        %v587 = vadd.f32 %v586, %v556
        %v588 = vadd.f32 %v587, %v557
        %v589 = vadd.f32 %v588, %v558
        %v590 = vadd.f32 %v589, %v559
        %v591 = vadd.f32 %v590, %v560
        %v592 = vadd.f32 %v591, %v561
        %v593 = vadd.f32 %v592, %v562
        %v594 = vadd.f32 %v593, %v563
        %v595 = vadd.f32 %v594, %v564
        %v596 = vadd.f32 %v595, %v565
        %v597 = vadd.f32 %v596, %v566
        %v598 = vadd.f32 %v597, %v567
        %v599 = vadd.f32 %v598, %v568
        %v600 = vadd.f32 %v599, %v569
        %v601 = vrot.slane %v600, 4
        %v602 = vadd.f32 %v600, %v601
        %v603 = vrot.slane %v602, 2
        %v604 = vadd.f32 %v602, %v603
        %v605 = vrot.slane %v604, 1
        %v606 = vadd.f32 %v604, %v605
        %v607 = vmul.f32 %v606, 0.00390625
        %s608 = scalar_lea.vmem [#allocation2], %s16
        %609 = vst [vmem:[%s608] sm:$0x1] %v607
        %p610 = scmp.eq.s32.totalorder %s16, 1
        // Predicated region
        $region37: #{byol_forward_pallas.1} parent=35 // pred_check
          %p611 = pneg %p610
        $region38: #{byol_forward_pallas.1} parent=35 // pred_check_branch
          %613 = sbr.rel (%p611) target = $region40
        $region39: #{byol_forward_pallas.1} parent=35 // pred_region
          %v614 = vld [vmem:[#allocation2] sm:$0x3]
          %v615 = vld [vmem:[%s2] sm:$0xff]
          %v616 = vld [vmem:[%s2 + $0x8] sm:$0xff]
          %v617 = vld [vmem:[%s2 + $0x10] sm:$0xff]
          %v618 = vld [vmem:[%s2 + $0x18] sm:$0xff]
          %v619 = vld [vmem:[%s2 + $0x20] sm:$0xff]
          %v620 = vld [vmem:[%s2 + $0x28] sm:$0xff]
          %v621 = vld [vmem:[%s2 + $0x30] sm:$0xff]
          %v622 = vld [vmem:[%s2 + $0x38] sm:$0xff]
          %v623 = vld [vmem:[%s2 + $0x40] sm:$0xff]
          %v624 = vld [vmem:[%s2 + $0x48] sm:$0xff]
          %v625 = vld [vmem:[%s2 + $0x50] sm:$0xff]
          %v626 = vld [vmem:[%s2 + $0x58] sm:$0xff]
          %v627 = vld [vmem:[%s2 + $0x60] sm:$0xff]
          %v628 = vld [vmem:[%s2 + $0x68] sm:$0xff]
          %v629 = vld [vmem:[%s2 + $0x70] sm:$0xff]
          %v630 = vld [vmem:[%s2 + $0x78] sm:$0xff]
          %631 = vmatprep.subr.mxu0 0.0
          %632 = vmatpush1.msra.mxu0 %v615
          %633 = vmatprep.subr.mxu0 0.0
          %634 = vmatpush1.msra.mxu0 %v616
          %635 = vmatprep.subr.mxu0 0.0
          %636 = vmatpush1.msra.mxu0 %v617
          %637 = vmatprep.subr.mxu0 0.0
          %638 = vmatpush1.msra.mxu0 %v618
          %639 = vmatprep.subr.mxu0 0.0
          %640 = vmatpush1.msra.mxu0 %v619
          %641 = vmatprep.subr.mxu0 0.0
          %642 = vmatpush1.msra.mxu0 %v620
          %643 = vmatprep.subr.mxu0 0.0
          %644 = vmatpush1.msra.mxu0 %v621
          %645 = vmatprep.subr.mxu0 0.0
          %646 = vmatpush1.msra.mxu0 %v622
          %647 = vmatprep.subr.mxu0 0.0
          %648 = vmatpush1.msra.mxu0 %v623
          %649 = vmatprep.subr.mxu0 0.0
          %650 = vmatpush1.msra.mxu0 %v624
          %651 = vmatprep.subr.mxu0 0.0
          %652 = vmatpush1.msra.mxu0 %v625
          %653 = vmatprep.subr.mxu0 0.0
          %654 = vmatpush1.msra.mxu0 %v626
          %655 = vmatprep.subr.mxu0 0.0
          %656 = vmatpush1.msra.mxu0 %v627
          %657 = vmatprep.subr.mxu0 0.0
          %658 = vmatpush1.msra.mxu0 %v628
          %659 = vmatprep.subr.mxu0 0.0
          %660 = vmatpush1.msra.mxu0 %v629
          %661 = vmatprep.subr.mxu0 0.0
          %662 = vmatpush1.msra.mxu0 %v630
          %663 = vmatprep.subr.mxu0 0.0
          %664 = vmatpush1.msra.mxu0 0.0
          %665 = vmatprep.subr.mxu0 0.0
          %666 = vmatpush1.msra.mxu0 0.0
          %667 = vmatprep.subr.mxu0 0.0
          %668 = vmatpush1.msra.mxu0 0.0
          %669 = vmatprep.subr.mxu0 0.0
          %670 = vmatpush1.msra.mxu0 0.0
          %671 = vmatprep.subr.mxu0 0.0
          %672 = vmatpush1.msra.mxu0 0.0
          %673 = vmatprep.subr.mxu0 0.0
          %674 = vmatpush1.msra.mxu0 0.0
          %675 = vmatprep.subr.mxu0 0.0
          %676 = vmatpush1.msra.mxu0 0.0
          %677 = vmatprep.subr.mxu0 0.0
          %678 = vmatpush1.msra.mxu0 0.0
          %679 = vmatprep.subr.mxu0 0.0
          %680 = vmatpush1.msra.mxu0 0.0
          %681 = vmatprep.subr.mxu0 0.0
          %682 = vmatpush1.msra.mxu0 0.0
          %683 = vmatprep.subr.mxu0 0.0
          %684 = vmatpush1.msra.mxu0 0.0
          %685 = vmatprep.subr.mxu0 0.0
          %686 = vmatpush1.msra.mxu0 0.0
          %687 = vmatprep.subr.mxu0 0.0
          %688 = vmatpush1.msra.mxu0 0.0
          %689 = vmatprep.subr.mxu0 0.0
          %690 = vmatpush1.msra.mxu0 0.0
          %691 = vmatprep.subr.mxu0 0.0
          %692 = vmatpush1.msra.mxu0 0.0
          %693 = vmatprep.subr.mxu0 0.0
          %694 = vmatpush1.msra.mxu0 0.0
          %695 = vmatprep.mubr.f32.mxu0 0.0
          %696 = vmatmul.mubr.f32.gmra.mrb[0].mxu0 %v614
          %v697 = vpop.f32.mrb[0].mxu0
          %v698 = vadd.f32 0.0, %v697
          %v699 = vpop.f32.mrb[0].mxu0
          %700 = vdwg.mxu0
          %vm701 = vcmask 517120
          %v702 = vsel %vm701, %v698, 0.0
          %v703 = vrot.slane %v702, 4
          %v704 = vadd.f32 %v702, %v703
          %v705 = vrot.slane %v704, 2
          %v706 = vadd.f32 %v704, %v705
          %v707 = vrot.slane %v706, 1
          %v708 = vadd.f32 %v706, %v707
          %v709 = vrcp.pop 2.0
          %v710 = vmul.f32 %v708, %v709
          %v711 = vsub.f32 %v698, %v710
          %v712 = vmul.f32 %v711, %v711
          %v713 = vsel %vm701, %v712, 0.0
          %v714 = vrot.slane %v713, 4
          %v715 = vadd.f32 %v713, %v714
          %v716 = vrot.slane %v715, 2
          %v717 = vadd.f32 %v715, %v716
          %v718 = vrot.slane %v717, 1
          %v719 = vadd.f32 %v717, %v718
          %v720 = vmul.f32 %v719, %v709
          %v721 = vadd.f32 %v720, 1e-05
          %v722 = vrsqrt.pop %v721
          %v723 = vmul.f32 %v711, %v722
          %v724 = vld [vmem:[%s3 + $0x1] sm:$0x1]
          %v725 = vlaneseq
          %v726 = vshrl.u32 %v725, 7
          %v727 = vsub.s32 0, %v726
          %v728 = vrot.slane %v724, %v727
          %v729 = vmul.f32 %v723, %v728
          %v730 = vld [vmem:[%s3 + $0x2] sm:$0x1]
          %v731 = vlaneseq
          %v732 = vshrl.u32 %v731, 7
          %v733 = vsub.s32 0, %v732
          %v734 = vrot.slane %v730, %v733
          %v735 = vadd.f32 %v729, %v734
          %v736 = vmax.f32 %v735, 0.0
          %v737 = vld [vmem:[%s2 + $0x80] sm:$0xff]
          %v738 = vld [vmem:[%s2 + $0x88] sm:$0xff]
          %v739 = vld [vmem:[%s2 + $0x90] sm:$0xff]
          %v740 = vld [vmem:[%s2 + $0x98] sm:$0xff]
          %v741 = vld [vmem:[%s2 + $0xa0] sm:$0xff]
          %v742 = vld [vmem:[%s2 + $0xa8] sm:$0xff]
          %v743 = vld [vmem:[%s2 + $0xb0] sm:$0xff]
          %v744 = vld [vmem:[%s2 + $0xb8] sm:$0xff]
          %v745 = vld [vmem:[%s3 + $0x3] sm:$0x1]
          %v746 = vlaneseq
          %v747 = vshrl.u32 %v746, 7
          %v748 = vsub.s32 0, %v747
          %v749 = vrot.slane %v745, %v748
          %vm750 = vcmask 523264
          %v752 = vsel %vm750, %v736, 0
          %754 = vmatprep.subr.mxu0 0.0
          %755 = vmatpush1.msra.mxu0 %v737
          %756 = vmatprep.subr.mxu0 0.0
          %757 = vmatpush1.msra.mxu0 %v738
          %758 = vmatprep.subr.mxu0 0.0
          %759 = vmatpush1.msra.mxu0 %v739
          %760 = vmatprep.subr.mxu0 0.0
          %761 = vmatpush1.msra.mxu0 %v740
          %762 = vmatprep.subr.mxu0 0.0
          %763 = vmatpush1.msra.mxu0 %v741
          %764 = vmatprep.subr.mxu0 0.0
          %765 = vmatpush1.msra.mxu0 %v742
          %766 = vmatprep.subr.mxu0 0.0
          %767 = vmatpush1.msra.mxu0 %v743
          %768 = vmatprep.subr.mxu0 0.0
          %769 = vmatpush1.msra.mxu0 %v744
          %770 = vmatprep.subr.mxu0 0.0
          %771 = vmatpush1.msra.mxu0 0.0
          %772 = vmatprep.subr.mxu0 0.0
          %773 = vmatpush1.msra.mxu0 0.0
          %774 = vmatprep.subr.mxu0 0.0
          %775 = vmatpush1.msra.mxu0 0.0
          %776 = vmatprep.subr.mxu0 0.0
          %777 = vmatpush1.msra.mxu0 0.0
          %778 = vmatprep.subr.mxu0 0.0
          %779 = vmatpush1.msra.mxu0 0.0
          %780 = vmatprep.subr.mxu0 0.0
          %781 = vmatpush1.msra.mxu0 0.0
          %782 = vmatprep.subr.mxu0 0.0
          %783 = vmatpush1.msra.mxu0 0.0
          %784 = vmatprep.subr.mxu0 0.0
          %785 = vmatpush1.msra.mxu0 0.0
          %786 = vmatprep.subr.mxu0 0.0
          %787 = vmatpush1.msra.mxu0 0.0
          %788 = vmatprep.subr.mxu0 0.0
          %789 = vmatpush1.msra.mxu0 0.0
          %790 = vmatprep.subr.mxu0 0.0
          %791 = vmatpush1.msra.mxu0 0.0
          %792 = vmatprep.subr.mxu0 0.0
          %793 = vmatpush1.msra.mxu0 0.0
          %794 = vmatprep.subr.mxu0 0.0
          %795 = vmatpush1.msra.mxu0 0.0
          %796 = vmatprep.subr.mxu0 0.0
          %797 = vmatpush1.msra.mxu0 0.0
          %798 = vmatprep.subr.mxu0 0.0
          %799 = vmatpush1.msra.mxu0 0.0
          %800 = vmatprep.subr.mxu0 0.0
          %801 = vmatpush1.msra.mxu0 0.0
          %802 = vmatprep.subr.mxu0 0.0
          %803 = vmatpush1.msra.mxu0 0.0
          %804 = vmatprep.subr.mxu0 0.0
          %805 = vmatpush1.msra.mxu0 0.0
          %806 = vmatprep.subr.mxu0 0.0
          %807 = vmatpush1.msra.mxu0 0.0
          %808 = vmatprep.subr.mxu0 0.0
          %809 = vmatpush1.msra.mxu0 0.0
          %810 = vmatprep.subr.mxu0 0.0
          %811 = vmatpush1.msra.mxu0 0.0
          %812 = vmatprep.subr.mxu0 0.0
          %813 = vmatpush1.msra.mxu0 0.0
          %814 = vmatprep.subr.mxu0 0.0
          %815 = vmatpush1.msra.mxu0 0.0
          %816 = vmatprep.subr.mxu0 0.0
          %817 = vmatpush1.msra.mxu0 0.0
          %818 = vmatprep.mubr.f32.mxu0 0.0
          %819 = vmatmul.mubr.f32.gmra.mrb[0].mxu0 %v752
          %v820 = vpop.f32.mrb[0].mxu0
          %v821 = vadd.f32 %v749, %v820
          %v822 = vpop.f32.mrb[0].mxu0
          %823 = vdwg.mxu0
          %v824 = vld [vmem:[%s2 + $0xc0] sm:$0xff]
          %v825 = vld [vmem:[%s2 + $0xc8] sm:$0xff]
          %vm826 = vcmask 130048
          %v828 = vsel %vm826, %v821, 0
          %830 = vmatprep.subr.mxu0 0.0
          %831 = vmatpush1.msra.mxu0 %v824
          %832 = vmatprep.subr.mxu0 0.0
          %833 = vmatpush1.msra.mxu0 %v825
          %834 = vmatprep.subr.mxu0 0.0
          %835 = vmatpush1.msra.mxu0 0.0
          %836 = vmatprep.subr.mxu0 0.0
          %837 = vmatpush1.msra.mxu0 0.0
          %838 = vmatprep.subr.mxu0 0.0
          %839 = vmatpush1.msra.mxu0 0.0
          %840 = vmatprep.subr.mxu0 0.0
          %841 = vmatpush1.msra.mxu0 0.0
          %842 = vmatprep.subr.mxu0 0.0
          %843 = vmatpush1.msra.mxu0 0.0
          %844 = vmatprep.subr.mxu0 0.0
          %845 = vmatpush1.msra.mxu0 0.0
          %846 = vmatprep.subr.mxu0 0.0
          %847 = vmatpush1.msra.mxu0 0.0
          %848 = vmatprep.subr.mxu0 0.0
          %849 = vmatpush1.msra.mxu0 0.0
          %850 = vmatprep.subr.mxu0 0.0
          %851 = vmatpush1.msra.mxu0 0.0
          %852 = vmatprep.subr.mxu0 0.0
          %853 = vmatpush1.msra.mxu0 0.0
          %854 = vmatprep.subr.mxu0 0.0
          %855 = vmatpush1.msra.mxu0 0.0
          %856 = vmatprep.subr.mxu0 0.0
          %857 = vmatpush1.msra.mxu0 0.0
          %858 = vmatprep.subr.mxu0 0.0
          %859 = vmatpush1.msra.mxu0 0.0
          %860 = vmatprep.subr.mxu0 0.0
          %861 = vmatpush1.msra.mxu0 0.0
          %862 = vmatprep.subr.mxu0 0.0
          %863 = vmatpush1.msra.mxu0 0.0
          %864 = vmatprep.subr.mxu0 0.0
          %865 = vmatpush1.msra.mxu0 0.0
          %866 = vmatprep.subr.mxu0 0.0
          %867 = vmatpush1.msra.mxu0 0.0
          %868 = vmatprep.subr.mxu0 0.0
          %869 = vmatpush1.msra.mxu0 0.0
          %870 = vmatprep.subr.mxu0 0.0
          %871 = vmatpush1.msra.mxu0 0.0
          %872 = vmatprep.subr.mxu0 0.0
          %873 = vmatpush1.msra.mxu0 0.0
          %874 = vmatprep.subr.mxu0 0.0
          %875 = vmatpush1.msra.mxu0 0.0
          %876 = vmatprep.subr.mxu0 0.0
          %877 = vmatpush1.msra.mxu0 0.0
          %878 = vmatprep.subr.mxu0 0.0
          %879 = vmatpush1.msra.mxu0 0.0
          %880 = vmatprep.subr.mxu0 0.0
          %881 = vmatpush1.msra.mxu0 0.0
          %882 = vmatprep.subr.mxu0 0.0
          %883 = vmatpush1.msra.mxu0 0.0
          %884 = vmatprep.subr.mxu0 0.0
          %885 = vmatpush1.msra.mxu0 0.0
          %886 = vmatprep.subr.mxu0 0.0
          %887 = vmatpush1.msra.mxu0 0.0
          %888 = vmatprep.subr.mxu0 0.0
          %889 = vmatpush1.msra.mxu0 0.0
          %890 = vmatprep.subr.mxu0 0.0
          %891 = vmatpush1.msra.mxu0 0.0
          %892 = vmatprep.subr.mxu0 0.0
          %893 = vmatpush1.msra.mxu0 0.0
          %894 = vmatprep.mubr.f32.mxu0 0.0
          %895 = vmatmul.mubr.f32.gmra.mrb[0].mxu0 %v828
          %v896 = vpop.f32.mrb[0].mxu0
          %v897 = vadd.f32 0.0, %v896
          %v898 = vpop.f32.mrb[0].mxu0
          %899 = vdwg.mxu0
          %vm900 = vcmask 254976
          %v901 = vsel %vm900, %v897, 0.0
          %v902 = vrot.slane %v901, 4
          %v903 = vadd.f32 %v901, %v902
          %v904 = vrot.slane %v903, 2
          %v905 = vadd.f32 %v903, %v904
          %v906 = vrot.slane %v905, 1
          %v907 = vadd.f32 %v905, %v906
          %v908 = vmul.f32 %v907, %v709
          %v909 = vsub.f32 %v897, %v908
          %v910 = vmul.f32 %v909, %v909
          %v911 = vsel %vm900, %v910, 0.0
          %v912 = vrot.slane %v911, 4
          %v913 = vadd.f32 %v911, %v912
          %v914 = vrot.slane %v913, 2
          %v915 = vadd.f32 %v913, %v914
          %v916 = vrot.slane %v915, 1
          %v917 = vadd.f32 %v915, %v916
          %v918 = vmul.f32 %v917, %v709
          %v919 = vadd.f32 %v918, 1e-05
          %v920 = vrsqrt.pop %v919
          %v921 = vmul.f32 %v909, %v920
          %v922 = vld [vmem:[%s3 + $0x4] sm:$0x1]
          %v923 = vlaneseq
          %v924 = vshrl.u32 %v923, 7
          %v925 = vsub.s32 0, %v924
          %v926 = vrot.slane %v922, %v925
          %v927 = vmul.f32 %v921, %v926
          %v928 = vld [vmem:[%s3 + $0x5] sm:$0x1]
          %v929 = vlaneseq
          %v930 = vshrl.u32 %v929, 7
          %v931 = vsub.s32 0, %v930
          %v932 = vrot.slane %v928, %v931
          %v933 = vadd.f32 %v927, %v932
          %v934 = vmax.f32 %v933, 0.0
          %v935 = vld [vmem:[%s2 + $0xd0] sm:$0xff]
          %v936 = vld [vmem:[%s2 + $0xd8] sm:$0xff]
          %v937 = vld [vmem:[%s2 + $0xe0] sm:$0xff]
          %v938 = vld [vmem:[%s2 + $0xe8] sm:$0xff]
          %v939 = vld [vmem:[%s3 + $0x6] sm:$0x1]
          %v940 = vlaneseq
          %v941 = vshrl.u32 %v940, 7
          %v942 = vsub.s32 0, %v941
          %v943 = vrot.slane %v939, %v942
          %vm944 = vcmask 261120
          %v946 = vsel %vm944, %v934, 0
          %948 = vmatprep.subr.mxu0 0.0
          %949 = vmatpush1.msra.mxu0 %v935
          %950 = vmatprep.subr.mxu0 0.0
          %951 = vmatpush1.msra.mxu0 %v936
          %952 = vmatprep.subr.mxu0 0.0
          %953 = vmatpush1.msra.mxu0 %v937
          %954 = vmatprep.subr.mxu0 0.0
          %955 = vmatpush1.msra.mxu0 %v938
          %956 = vmatprep.subr.mxu0 0.0
          %957 = vmatpush1.msra.mxu0 0.0
          %958 = vmatprep.subr.mxu0 0.0
          %959 = vmatpush1.msra.mxu0 0.0
          %960 = vmatprep.subr.mxu0 0.0
          %961 = vmatpush1.msra.mxu0 0.0
          %962 = vmatprep.subr.mxu0 0.0
          %963 = vmatpush1.msra.mxu0 0.0
          %964 = vmatprep.subr.mxu0 0.0
          %965 = vmatpush1.msra.mxu0 0.0
          %966 = vmatprep.subr.mxu0 0.0
          %967 = vmatpush1.msra.mxu0 0.0
          %968 = vmatprep.subr.mxu0 0.0
          %969 = vmatpush1.msra.mxu0 0.0
          %970 = vmatprep.subr.mxu0 0.0
          %971 = vmatpush1.msra.mxu0 0.0
          %972 = vmatprep.subr.mxu0 0.0
          %973 = vmatpush1.msra.mxu0 0.0
          %974 = vmatprep.subr.mxu0 0.0
          %975 = vmatpush1.msra.mxu0 0.0
          %976 = vmatprep.subr.mxu0 0.0
          %977 = vmatpush1.msra.mxu0 0.0
          %978 = vmatprep.subr.mxu0 0.0
          %979 = vmatpush1.msra.mxu0 0.0
          %980 = vmatprep.subr.mxu0 0.0
          %981 = vmatpush1.msra.mxu0 0.0
          %982 = vmatprep.subr.mxu0 0.0
          %983 = vmatpush1.msra.mxu0 0.0
          %984 = vmatprep.subr.mxu0 0.0
          %985 = vmatpush1.msra.mxu0 0.0
          %986 = vmatprep.subr.mxu0 0.0
          %987 = vmatpush1.msra.mxu0 0.0
          %988 = vmatprep.subr.mxu0 0.0
          %989 = vmatpush1.msra.mxu0 0.0
          %990 = vmatprep.subr.mxu0 0.0
          %991 = vmatpush1.msra.mxu0 0.0
          %992 = vmatprep.subr.mxu0 0.0
          %993 = vmatpush1.msra.mxu0 0.0
          %994 = vmatprep.subr.mxu0 0.0
          %995 = vmatpush1.msra.mxu0 0.0
          %996 = vmatprep.subr.mxu0 0.0
          %997 = vmatpush1.msra.mxu0 0.0
          %998 = vmatprep.subr.mxu0 0.0
          %999 = vmatpush1.msra.mxu0 0.0
          %1000 = vmatprep.subr.mxu0 0.0
          %1001 = vmatpush1.msra.mxu0 0.0
          %1002 = vmatprep.subr.mxu0 0.0
          %1003 = vmatpush1.msra.mxu0 0.0
          %1004 = vmatprep.subr.mxu0 0.0
          %1005 = vmatpush1.msra.mxu0 0.0
          %1006 = vmatprep.subr.mxu0 0.0
          %1007 = vmatpush1.msra.mxu0 0.0
          %1008 = vmatprep.subr.mxu0 0.0
          %1009 = vmatpush1.msra.mxu0 0.0
          %1010 = vmatprep.subr.mxu0 0.0
          %1011 = vmatpush1.msra.mxu0 0.0
          %1012 = vmatprep.mubr.f32.mxu0 0.0
          %1013 = vmatmul.mubr.f32.gmra.mrb[0].mxu0 %v946
          %v1014 = vpop.f32.mrb[0].mxu0
          %v1015 = vadd.f32 %v943, %v1014
          %v1016 = vpop.f32.mrb[0].mxu0
          %1017 = vdwg.mxu0
          %vm1018 = vcmask 123904
          %1019 = vst.msk [vmem:[#allocation3] sm:$0x3] %vm1018, %v1015
        $region40: #{byol_forward_pallas.1} parent=35 // pred_fallthru
          _
        // Predicated region
        $region41: #{byol_forward_pallas.1} parent=35 // pred_check
          %p1020 = pneg %p118
        $region42: #{byol_forward_pallas.1} parent=35 // pred_check_branch
          %1022 = sbr.rel (%p1020) target = $region44
        $region43: #{byol_forward_pallas.1} parent=35 // pred_region
          %s1024 = ssub.s32 32, 32
          %1025 = vsyncadd [#allocation4], %s1024
          %s1027 = sshll.u32 [#allocation3], 4
          %s1028 = int_to_ptr.vmem [resolvable:$true] %s1027
          %1030 = dma.vmem_to_hbm [thread:$0]  %s1028, 32, %s4, [#allocation4]
        $region44: #{byol_forward_pallas.1} parent=35 // pred_fallthru
          _
        // Predicated region
        $region45: #{byol_forward_pallas.1} parent=35 // pred_check
          %p1031 = pneg %p118
        $region46: #{byol_forward_pallas.1} parent=35 // pred_check_branch
          %1033 = sbr.rel (%p1031) target = $region48
        $region47: #{byol_forward_pallas.1} parent=35 // pred_region
          %1034 = dma.done [#allocation4], 32
        $region48: #{byol_forward_pallas.1} parent=35 // pred_fallthru
          _
      $region36: #{byol_forward_pallas.1} parent=5 // pred_fallthru
        _
      %p1035 = scmp.le.s32.totalorder 2, %s11
      // Predicated region
      $region49: #{byol_forward_pallas.1} parent=5 // pred_check
        %p1036 = pneg %p1035
      $region50: #{byol_forward_pallas.1} parent=5 // pred_check_branch
        %1038 = sbr.rel (%p1036) target = $region52
      $region51: #{byol_forward_pallas.1} parent=5 // pred_region
        %s1039 = ssub.s32 %s11, 2
      $region52: #{byol_forward_pallas.1} parent=5 // pred_fallthru
        _
    $region6: #{byol_forward_pallas.1} parent=1 // loop_footer
      %s15 = sadd.s32 1, %s11
    $region7: #{byol_forward_pallas.1} parent=1 // loop_footer_branch
      %10 = sbr.rel target = $region3
    $region8: #{byol_forward_pallas.1} parent=1 // loop_exit
      _
    %1040 = vsyncpa [#allocation4], 1
    %s1041 = scalar_lea.sflag [#allocation4], 1
    %1042 = vsyncpa %s1041, 1

</llo_original>
